<compile_context>
chip_gen: v7x
topology: tpu7x:2x2x1
jax: 0.10.0
libtpu: 0.0.40
codegen_flags: <defaults>
</compile_context>

<pallas_src>
import functools

import jax
import jax.numpy as jnp
from jax.experimental import pallas as pl
from jax.experimental.pallas import tpu as pltpu

_SUBLANE = 16  # bf16 packs two rows per sublane -> 16-row padding granularity


def _round_up(x, m):
    return (x + m - 1) // m * m


def _pad_rows(x, n_rows):
    if x.shape[0] == n_rows:
        return x
    return jnp.pad(x, ((0, n_rows - x.shape[0]), (0, 0)))


def _nbytes(shape, dtype):
    n = 1
    for s in shape:
        n *= int(s)
    return n * jnp.dtype(dtype).itemsize


@functools.lru_cache(maxsize=1)
def _vmem_limit_bytes():
    """Per-generation scoped-VMEM cap: 3/4 of physical VMEM, capped at 96 MiB.

    v5e/v6e (128 MiB) -> 96 MiB; v7x (64 MiB per TC) -> 48 MiB.
    """
    try:
        cap = int(pltpu.get_tpu_info().vmem_capacity_bytes)
    except Exception:  # emulator / unknown chip
        cap = 128 * 1024 * 1024
    return int(min(cap * 3 // 4, 96 * 1024 * 1024))


def _resident(shape):
    """BlockSpec for a grid-invariant operand: VMEM-resident, single-buffered."""
    return pl.BlockSpec(shape, lambda *_: (0,) * len(shape),
                        pipeline_mode=pl.Buffered(1))


# ----------------------------------------------------------------------------
# Kernel 1: fused bias-free linear layers  y_i = x_i @ W_i^T
#           (one pallas_call, row-tiled grid, all weights VMEM-resident)
# ----------------------------------------------------------------------------
def _multi_linear_kernel(*refs, n):
    # refs = (x_0..x_{n-1}, w_0..w_{n-1}, o_0..o_{n-1})
    for i in range(n):
        x_ref, w_ref, o_ref = refs[i], refs[n + i], refs[2 * n + i]
        o_ref[...] = jax.lax.dot_general(
            x_ref[...], w_ref[...],
            dimension_numbers=(((1,), (1,)), ((), ())),   # contract last dims, no .T
            preferred_element_type=jnp.float32,
        ).astype(o_ref.dtype)


def multi_linear(xs, ws, out_dtype=jnp.bfloat16, row_tile=512):
    """Fused bias-free linears sharing the same row count.

    xs[i]: [N, d_in_i], ws[i]: [d_out_i, d_in_i] (PyTorch layout) -> [N, d_out_i].
    """
    n = len(xs)
    N = xs[0].shape[0]
    tile = min(row_tile, _round_up(N, _SUBLANE))
    n_pad = _round_up(N, tile)
    xs = [_pad_rows(x, n_pad) for x in xs]

    in_specs = [pl.BlockSpec((tile, x.shape[1]), lambda i: (i, 0)) for x in xs]
    in_specs += [_resident(w.shape) for w in ws]           # weights stay in VMEM
    out_specs = tuple(pl.BlockSpec((tile, w.shape[0]), lambda i: (i, 0)) for w in ws)
    out_shape = tuple(jax.ShapeDtypeStruct((n_pad, w.shape[0]), out_dtype) for w in ws)

    flops = 2 * n_pad * sum(w.shape[0] * w.shape[1] for w in ws)
    bytes_accessed = (sum(_nbytes(x.shape, x.dtype) for x in xs)
                      + sum(_nbytes(w.shape, w.dtype) for w in ws)
                      + sum(_nbytes((n_pad, w.shape[0]), out_dtype) for w in ws))

    outs = pl.pallas_call(
        functools.partial(_multi_linear_kernel, n=n),
        out_shape=out_shape,
        grid=(n_pad // tile,),
        in_specs=in_specs,
        out_specs=out_specs,
        compiler_params=pltpu.CompilerParams(
            dimension_semantics=("parallel",),
            vmem_limit_bytes=_vmem_limit_bytes(),
        ),
        cost_estimate=pl.CostEstimate(
            flops=int(flops), transcendentals=0, bytes_accessed=int(bytes_accessed)),
    )(*xs, *ws)
    if n_pad != N:
        outs = tuple(o[:N] for o in outs)
    return tuple(outs)


# ----------------------------------------------------------------------------
# Kernel 2: scaled dot-product attention
#   grid = (batch, query-tiles); one step processes all heads of one (b, q-tile)
#   inputs in [B, L, H*dh] layout, output written as one dense [tq, H*dv] slab
# ----------------------------------------------------------------------------
def _sdpa_kernel(q_ref, k_ref, v_ref, o_ref, *maybe_attn, n_head, d_k, d_v):
    # q_ref: [tq, H*dk], k_ref: [Lk, H*dk], v_ref: [Lk, H*dv]
    # o_ref: [tq, H*dv]; optional attn_ref: [H, tq, Lk]
    attn_ref = maybe_attn[0] if maybe_attn else None
    outs = []
    for h in range(n_head):                                # unrolled; heads are small
        qh = q_ref[:, h * d_k:(h + 1) * d_k]               # bf16, 1/temp pre-folded
        kh = k_ref[:, h * d_k:(h + 1) * d_k]
        vh = v_ref[:, h * d_v:(h + 1) * d_v]
        s = jax.lax.dot_general(                            # [tq, Lk] f32 accum
            qh, kh, dimension_numbers=(((1,), (1,)), ((), ())),
            preferred_element_type=jnp.float32)
        # numerically stable softmax over the key axis (f32 stats)
        m = jnp.max(s, axis=-1, keepdims=True)
        e = jnp.exp(s - m)
        recip = pl.reciprocal(jnp.sum(e, axis=-1, keepdims=True), approx=True)
        if attn_ref is not None:
            p = e * recip
            attn_ref[h] = p.astype(attn_ref.dtype)
            oh = jnp.dot(p.astype(vh.dtype), vh, preferred_element_type=jnp.float32)
        else:
            # fast path: normalize AFTER the PV matmul -> tq*d_v multiplies
            # instead of tq*Lk, and the bf16 cast is applied to e once.
            oh = jnp.dot(e.astype(vh.dtype), vh,
                         preferred_element_type=jnp.float32) * recip
        outs.append(oh)
    # single lane-dense store of the whole [tq, H*dv] slab
    o_ref[...] = jnp.concatenate(outs, axis=-1).astype(o_ref.dtype)


def scaled_dot_product_attention(qp, kp, vp, n_head, d_k, d_v, *,
                                 return_attn=False, attn_dtype=jnp.bfloat16,
                                 q_tile=512):
    """qp: [B,Lq,H*dk], kp: [B,Lk,H*dk], vp: [B,Lk,H*dv]
       -> (out [B,Lq,H*dv], attn [B,H,Lq,Lk] or None)."""
    B, Lq, _ = qp.shape
    Lk = kp.shape[1]

    tq = min(q_tile, _round_up(Lq, _SUBLANE))
    lq_pad = _round_up(Lq, tq)
    if lq_pad != Lq:
        qp = jnp.pad(qp, ((0, 0), (0, lq_pad - Lq), (0, 0)))
    n_q = lq_pad // tq

    kernel = functools.partial(_sdpa_kernel, n_head=n_head, d_k=d_k, d_v=d_v)

    out_shape = [jax.ShapeDtypeStruct((B, lq_pad, n_head * d_v), qp.dtype)]
    out_specs = [pl.BlockSpec((None, tq, n_head * d_v), lambda b, i: (b, i, 0))]
    if return_attn:
        out_shape.append(jax.ShapeDtypeStruct((B, n_head, lq_pad, Lk), attn_dtype))
        out_specs.append(
            pl.BlockSpec((None, n_head, tq, Lk), lambda b, i: (b, 0, i, 0)))

    flops = 2 * B * n_head * lq_pad * Lk * (d_k + d_v)
    transcendentals = B * n_head * lq_pad * Lk              # exp
    bytes_accessed = (_nbytes(qp.shape, qp.dtype) + _nbytes(kp.shape, kp.dtype)
                      + _nbytes(vp.shape, vp.dtype)
                      + _nbytes((B, lq_pad, n_head * d_v), qp.dtype)
                      + (_nbytes((B, n_head, lq_pad, Lk), attn_dtype)
                         if return_attn else 0))

    res = pl.pallas_call(
        kernel,
        out_shape=tuple(out_shape),
        grid=(B, n_q),
        in_specs=[
            pl.BlockSpec((None, tq, n_head * d_k), lambda b, i: (b, i, 0)),
            pl.BlockSpec((None, Lk, n_head * d_k), lambda b, i: (b, 0, 0)),  # K/V invariant over q-tiles
            pl.BlockSpec((None, Lk, n_head * d_v), lambda b, i: (b, 0, 0)),
        ],
        out_specs=tuple(out_specs),
        compiler_params=pltpu.CompilerParams(
            dimension_semantics=("parallel", "parallel"),   # batch & q-tiles split across TCs
            vmem_limit_bytes=_vmem_limit_bytes(),
        ),
        cost_estimate=pl.CostEstimate(
            flops=int(flops), transcendentals=int(transcendentals),
            bytes_accessed=int(bytes_accessed)),
    )(qp, kp, vp)

    out = res[0]
    attn = res[1] if return_attn else None
    if lq_pad != Lq:
        out = out[:, :Lq]
        if attn is not None:
            attn = attn[:, :, :Lq]
    return out, attn


# ----------------------------------------------------------------------------
# Kernel 3: fused output projection + residual add + LayerNorm (row-tiled)
# ----------------------------------------------------------------------------
def _fc_res_ln_kernel(x_ref, res_ref, w_ref, g_ref, b_ref, o_ref, *, eps):
    # x: [tile, H*dv] bf16, w: [d_model, H*dv] bf16, res: [tile, d_model] bf16
    y = jax.lax.dot_general(
        x_ref[...], w_ref[...],
        dimension_numbers=(((1,), (1,)), ((), ())),
        preferred_element_type=jnp.float32)
    # dropout is identity in eval mode
    y = y + res_ref[...].astype(jnp.float32)
    mean = jnp.mean(y, axis=-1, keepdims=True)
    var = jnp.mean(jnp.square(y - mean), axis=-1, keepdims=True)
    norm = (y - mean) * jax.lax.rsqrt(var + eps)
    o_ref[...] = (norm * g_ref[...] + b_ref[...]).astype(o_ref.dtype)


def fc_residual_layernorm(x, w_fc, residual, gamma, beta, *, eps=1e-5,
                          out_dtype=jnp.bfloat16, row_tile=512):
    """x: [N, H*dv], w_fc: [d_model, H*dv], residual: [N, d_model] -> [N, d_model]."""
    N, d_in = x.shape
    d_model = w_fc.shape[0]
    tile = min(row_tile, _round_up(N, _SUBLANE))
    n_pad = _round_up(N, tile)
    x = _pad_rows(x, n_pad)
    residual = _pad_rows(residual, n_pad)
    g2 = gamma.reshape(1, d_model).astype(jnp.float32)
    b2 = beta.reshape(1, d_model).astype(jnp.float32)

    flops = 2 * n_pad * d_in * d_model + 8 * n_pad * d_model
    bytes_accessed = (_nbytes((n_pad, d_in), x.dtype) + _nbytes(w_fc.shape, w_fc.dtype)
                      + _nbytes((n_pad, d_model), residual.dtype)
                      + 2 * _nbytes((1, d_model), jnp.float32)
                      + _nbytes((n_pad, d_model), out_dtype))

    y = pl.pallas_call(
        functools.partial(_fc_res_ln_kernel, eps=eps),
        out_shape=jax.ShapeDtypeStruct((n_pad, d_model), out_dtype),
        grid=(n_pad // tile,),
        in_specs=[
            pl.BlockSpec((tile, d_in), lambda i: (i, 0)),
            pl.BlockSpec((tile, d_model), lambda i: (i, 0)),
            _resident((d_model, d_in)),                     # weight: single-buffered
            _resident((1, d_model)),                        # gamma
            _resident((1, d_model)),                        # beta
        ],
        out_specs=pl.BlockSpec((tile, d_model), lambda i: (i, 0)),
        compiler_params=pltpu.CompilerParams(
            dimension_semantics=("parallel",),
            vmem_limit_bytes=_vmem_limit_bytes(),
        ),
        cost_estimate=pl.CostEstimate(
            flops=int(flops), transcendentals=int(n_pad),
            bytes_accessed=int(bytes_accessed)),
    )(x, residual, w_fc, g2, b2)
    if n_pad != N:
        y = y[:N]
    return y


# ----------------------------------------------------------------------------
# Module wrapper
# ----------------------------------------------------------------------------
class MultiHeadAttentionPallas:
    def __init__(self, n_head, d_model, d_k, d_v, key, compute_dtype=jnp.bfloat16,
                 out_dtype=jnp.float32):
        self.n_head = n_head
        self.d_model = d_model
        self.d_k = d_k
        self.d_v = d_v
        self.compute_dtype = compute_dtype
        self.out_dtype = out_dtype
        self.temperature = float(d_k) ** 0.5

        def init_linear(k, d_out, d_in):
            bound = 1.0 / (d_in ** 0.5)   # matches PyTorch nn.Linear default scale
            return jax.random.uniform(k, (d_out, d_in), jnp.float32,
                                      minval=-bound, maxval=bound)

        k1, k2, k3, k4 = jax.random.split(key, 4)
        # f32 master parameters (PyTorch layout [d_out, d_in]).
        self.w_qs = init_linear(k1, n_head * d_k, d_model)
        self.w_ks = init_linear(k2, n_head * d_k, d_model)
        self.w_vs = init_linear(k3, n_head * d_v, d_model)
        self.w_fc = init_linear(k4, d_model, n_head * d_v)
        self.ln_gamma = jnp.ones((d_model,), jnp.float32)
        self.ln_beta = jnp.zeros((d_model,), jnp.float32)

        # Kernel-side weights: 1/temperature folded into w_qs; one-time cast to
        # the MXU-native compute dtype (bf16 inputs, f32 accumulation in-kernel).
        self.w_qs_k = (self.w_qs / self.temperature).astype(compute_dtype)
        self.w_ks_k = self.w_ks.astype(compute_dtype)
        self.w_vs_k = self.w_vs.astype(compute_dtype)
        self.w_fc_k = self.w_fc.astype(compute_dtype)

    def __call__(self, q, k, v, mask=None, attn_bias=None, return_attn=True):
        """return_attn=True matches the PyTorch module's (output, attn) contract;
        pass return_attn=False for the fast path that skips the O(B*H*L^2)
        attention-probability write entirely."""
        if mask is not None or attn_bias is not None:
            # TODO(synk): mask / attn_bias paths not implemented.
            raise NotImplementedError("mask / attn_bias not supported")
        B, Lq, d_model = q.shape
        Lk = k.shape[1]
        H, dk, dv = self.n_head, self.d_k, self.d_v
        cdt = self.compute_dtype

        residual = q
        q2 = q.reshape(B * Lq, d_model).astype(cdt)
        k2 = k.reshape(B * Lk, d_model).astype(cdt)
        v2 = v.reshape(B * Lk, d_model).astype(cdt)

        # Fused Q/K/V projections in a single pallas_call when row counts match
        # (self-attention / equal lengths); otherwise fuse K and V only.
        if Lq == Lk:
            qp, kp, vp = multi_linear([q2, k2, v2],
                                      [self.w_qs_k, self.w_ks_k, self.w_vs_k],
                                      out_dtype=cdt)
        else:
            (qp,) = multi_linear([q2], [self.w_qs_k], out_dtype=cdt)
            kp, vp = multi_linear([k2, v2], [self.w_ks_k, self.w_vs_k], out_dtype=cdt)

        # Natural [B, L, H*dh] layout throughout -- no wrapper transposes.
        qp = qp.reshape(B, Lq, H * dk)
        kp = kp.reshape(B, Lk, H * dk)
        vp = vp.reshape(B, Lk, H * dv)

        out, attn = scaled_dot_product_attention(
            qp, kp, vp, H, dk, dv, return_attn=return_attn, attn_dtype=cdt)

        # fc + dropout(identity in eval) + residual + layer norm (fused kernel).
        # Residual is streamed in bf16 to halve the mem-bound kernel's HBM
        # traffic; LN statistics stay in f32 inside the kernel.
        y = fc_residual_layernorm(
            out.reshape(B * Lq, H * dv),
            self.w_fc_k,
            residual.reshape(B * Lq, d_model).astype(cdt),
            self.ln_gamma,
            self.ln_beta,
            out_dtype=self.out_dtype,
        ).reshape(B, Lq, d_model)
        return y, attn


# ----------------------------------------------------------------------------
# Pure-JAX f32 reference for sanity checking
# ----------------------------------------------------------------------------
def reference_forward(mha, q, k, v):
    B, Lq, d_model = q.shape
    Lk = k.shape[1]
    H, dk, dv = mha.n_head, mha.d_k, mha.d_v
    residual = q
    qh = (q @ mha.w_qs.T).reshape(B, Lq, H, dk).transpose(0, 2, 1, 3)
    kh = (k @ mha.w_ks.T).reshape(B, Lk, H, dk).transpose(0, 2, 1, 3)
    vh = (v @ mha.w_vs.T).reshape(B, Lk, H, dv).transpose(0, 2, 1, 3)
    scores = jnp.einsum("bhqd,bhkd->bhqk", qh / mha.temperature, kh)
    attn = jax.nn.softmax(scores, axis=-1)
    out = jnp.einsum("bhqk,bhkd->bhqd", attn, vh)
    out = out.transpose(0, 2, 1, 3).reshape(B, Lq, H * dv)
    y = out @ mha.w_fc.T + residual
    mean = jnp.mean(y, axis=-1, keepdims=True)
    var = jnp.mean((y - mean) ** 2, axis=-1, keepdims=True)
    y = (y - mean) / jnp.sqrt(var + 1e-5) * mha.ln_gamma + mha.ln_beta
    return y, attn


if __name__ == "__main__":
    # small deterministic example
    B, L, d_model = 2, 8, 32
    n_head, d_k, d_v = 4, 8, 8

    key = jax.random.PRNGKey(0)
    k_param, k_q, k_k, k_v = jax.random.split(key, 4)

    mha = MultiHeadAttentionPallas(n_head, d_model, d_k, d_v, k_param)

    q = jax.random.normal(k_q, (B, L, d_model), jnp.float32)
    k = jax.random.normal(k_k, (B, L, d_model), jnp.float32)
    v = jax.random.normal(k_v, (B, L, d_model), jnp.float32)

    # Full path (matches the PyTorch module: returns (output, attn)).
    out, attn = mha(q, k, v, return_attn=True)
    out = jax.block_until_ready(out)
    attn = jax.block_until_ready(attn)

    # Fast path (attn output skipped entirely).
    out_fast, attn_none = mha(q, k, v, return_attn=False)
    out_fast = jax.block_until_ready(out_fast)
    assert attn_none is None

    ref_out, ref_attn = reference_forward(mha, q, k, v)
    assert out.shape == (B, L, d_model)
    assert attn.shape == (B, n_head, L, L)
    # bf16 matmul inputs / bf16 residual stream (f32 accumulation & LN stats)
    # vs. the pure-f32 reference -> relaxed tolerances.
    assert jnp.allclose(out, ref_out, atol=6e-2, rtol=5e-2), \
        float(jnp.max(jnp.abs(out - ref_out)))
    assert jnp.allclose(out_fast, ref_out, atol=6e-2, rtol=5e-2), \
        float(jnp.max(jnp.abs(out_fast - ref_out)))
    attn_f32 = attn.astype(jnp.float32)
    assert jnp.allclose(attn_f32, ref_attn, atol=1e-2, rtol=1e-2), \
        float(jnp.max(jnp.abs(attn_f32 - ref_attn)))

    print("KERNEL_OK")
</pallas_src>

<mosaic_0001>
module attributes {stable_mosaic.version = 11 : i64} {
  func.func @_multi_linear_kernel(%arg0: i32, %arg1: memref<16x32xbf16, #tpu.memory_space<vmem>>, %arg2: memref<16x32xbf16, #tpu.memory_space<vmem>>, %arg3: memref<16x32xbf16, #tpu.memory_space<vmem>>, %arg4: memref<32x32xbf16, #tpu.memory_space<vmem>>, %arg5: memref<32x32xbf16, #tpu.memory_space<vmem>>, %arg6: memref<32x32xbf16, #tpu.memory_space<vmem>>, %arg7: memref<16x32xbf16, #tpu.memory_space<vmem>>, %arg8: memref<16x32xbf16, #tpu.memory_space<vmem>>, %arg9: memref<16x32xbf16, #tpu.memory_space<vmem>>) attributes {dimension_semantics = [#tpu.dimension_semantics<parallel>], iteration_bounds = array<i64: 1>, scalar_prefetch = 0 : i64, scratch_operands = 0 : i64, tpu.core_type = #tpu.core_type<tc>, window_params = [{transform_indices = @transform_0, window_bounds = array<i64: 16, 32>}, {transform_indices = @transform_1, window_bounds = array<i64: 16, 32>}, {transform_indices = @transform_2, window_bounds = array<i64: 16, 32>}, {pipeline_mode = #tpu.pipeline_mode<synchronous>, transform_indices = @transform_3, window_bounds = array<i64: 32, 32>}, {pipeline_mode = #tpu.pipeline_mode<synchronous>, transform_indices = @transform_4, window_bounds = array<i64: 32, 32>}, {pipeline_mode = #tpu.pipeline_mode<synchronous>, transform_indices = @transform_5, window_bounds = array<i64: 32, 32>}, {transform_indices = @transform_6, window_bounds = array<i64: 16, 32>}, {transform_indices = @transform_7, window_bounds = array<i64: 16, 32>}, {transform_indices = @transform_8, window_bounds = array<i64: 16, 32>}]} {
    %c0 = arith.constant 0 : index
    %c0_0 = arith.constant 0 : index
    %0 = vector.load %arg1[%c0, %c0_0] : memref<16x32xbf16, #tpu.memory_space<vmem>>, vector<16x32xbf16>
    %c0_1 = arith.constant 0 : index
    %c0_2 = arith.constant 0 : index
    %1 = vector.load %arg4[%c0_1, %c0_2] : memref<32x32xbf16, #tpu.memory_space<vmem>>, vector<32x32xbf16>
    %cst = arith.constant dense<0.000000e+00> : vector<16x32xf32>
    %2 = tpu.matmul %0, %1, %cst {dimension_numbers = #tpu.dot_dimension_numbers<[1], [1], [0], [0], [0, 0, 1, 0], [], []>} : vector<16x32xbf16>, vector<32x32xbf16>, vector<16x32xf32> -> vector<16x32xf32>
    %3 = arith.truncf %2 : vector<16x32xf32> to vector<16x32xbf16>
    %c0_3 = arith.constant 0 : index
    %c0_4 = arith.constant 0 : index
    %4 = vector.load %arg7[%c0_3, %c0_4] : memref<16x32xbf16, #tpu.memory_space<vmem>>, vector<16x32xbf16>
    tpu.vector_store %arg7[%c0_3, %c0_4], %3 {strides = array<i32>} : memref<16x32xbf16, #tpu.memory_space<vmem>>, vector<16x32xbf16>,
    %c0_5 = arith.constant 0 : index
    %c0_6 = arith.constant 0 : index
    %5 = vector.load %arg2[%c0_5, %c0_6] : memref<16x32xbf16, #tpu.memory_space<vmem>>, vector<16x32xbf16>
    %c0_7 = arith.constant 0 : index
    %c0_8 = arith.constant 0 : index
    %6 = vector.load %arg5[%c0_7, %c0_8] : memref<32x32xbf16, #tpu.memory_space<vmem>>, vector<32x32xbf16>
    %cst_9 = arith.constant dense<0.000000e+00> : vector<16x32xf32>
    %7 = tpu.matmul %5, %6, %cst_9 {dimension_numbers = #tpu.dot_dimension_numbers<[1], [1], [0], [0], [0, 0, 1, 0], [], []>} : vector<16x32xbf16>, vector<32x32xbf16>, vector<16x32xf32> -> vector<16x32xf32>
    %8 = arith.truncf %7 : vector<16x32xf32> to vector<16x32xbf16>
    %c0_10 = arith.constant 0 : index
    %c0_11 = arith.constant 0 : index
    %9 = vector.load %arg8[%c0_10, %c0_11] : memref<16x32xbf16, #tpu.memory_space<vmem>>, vector<16x32xbf16>
    tpu.vector_store %arg8[%c0_10, %c0_11], %8 {strides = array<i32>} : memref<16x32xbf16, #tpu.memory_space<vmem>>, vector<16x32xbf16>,
    %c0_12 = arith.constant 0 : index
    %c0_13 = arith.constant 0 : index
    %10 = vector.load %arg3[%c0_12, %c0_13] : memref<16x32xbf16, #tpu.memory_space<vmem>>, vector<16x32xbf16>
    %c0_14 = arith.constant 0 : index
    %c0_15 = arith.constant 0 : index
    %11 = vector.load %arg6[%c0_14, %c0_15] : memref<32x32xbf16, #tpu.memory_space<vmem>>, vector<32x32xbf16>
    %cst_16 = arith.constant dense<0.000000e+00> : vector<16x32xf32>
    %12 = tpu.matmul %10, %11, %cst_16 {dimension_numbers = #tpu.dot_dimension_numbers<[1], [1], [0], [0], [0, 0, 1, 0], [], []>} : vector<16x32xbf16>, vector<32x32xbf16>, vector<16x32xf32> -> vector<16x32xf32>
    %13 = arith.truncf %12 : vector<16x32xf32> to vector<16x32xbf16>
    %c0_17 = arith.constant 0 : index
    %c0_18 = arith.constant 0 : index
    %14 = vector.load %arg9[%c0_17, %c0_18] : memref<16x32xbf16, #tpu.memory_space<vmem>>, vector<16x32xbf16>
    tpu.vector_store %arg9[%c0_17, %c0_18], %13 {strides = array<i32>} : memref<16x32xbf16, #tpu.memory_space<vmem>>, vector<16x32xbf16>,
    return
  }
  func.func @transform_0(%arg0: i32) -> (i32, i32) {
    %c0_i32 = arith.constant 0 : i32
    %c0_i32_0 = arith.constant 0 : i32
    return %arg0, %c0_i32 : i32, i32
  }
  func.func @transform_1(%arg0: i32) -> (i32, i32) {
    %c0_i32 = arith.constant 0 : i32
    %c0_i32_0 = arith.constant 0 : i32
    return %arg0, %c0_i32 : i32, i32
  }
  func.func @transform_2(%arg0: i32) -> (i32, i32) {
    %c0_i32 = arith.constant 0 : i32
    %c0_i32_0 = arith.constant 0 : i32
    return %arg0, %c0_i32 : i32, i32
  }
  func.func @transform_3(%arg0: i32) -> (i32, i32) {
    %c0_i32 = arith.constant 0 : i32
    %c0_i32_0 = arith.constant 0 : i32
    %c0_i32_1 = arith.constant 0 : i32
    return %c0_i32, %c0_i32_0 : i32, i32
  }
  func.func @transform_4(%arg0: i32) -> (i32, i32) {
    %c0_i32 = arith.constant 0 : i32
    %c0_i32_0 = arith.constant 0 : i32
    %c0_i32_1 = arith.constant 0 : i32
    return %c0_i32, %c0_i32_0 : i32, i32
  }
  func.func @transform_5(%arg0: i32) -> (i32, i32) {
    %c0_i32 = arith.constant 0 : i32
    %c0_i32_0 = arith.constant 0 : i32
    %c0_i32_1 = arith.constant 0 : i32
    return %c0_i32, %c0_i32_0 : i32, i32
  }
  func.func @transform_6(%arg0: i32) -> (i32, i32) {
    %c0_i32 = arith.constant 0 : i32
    %c0_i32_0 = arith.constant 0 : i32
    return %arg0, %c0_i32 : i32, i32
  }
  func.func @transform_7(%arg0: i32) -> (i32, i32) {
    %c0_i32 = arith.constant 0 : i32
    %c0_i32_0 = arith.constant 0 : i32
    return %arg0, %c0_i32 : i32, i32
  }
  func.func @transform_8(%arg0: i32) -> (i32, i32) {
    %c0_i32 = arith.constant 0 : i32
    %c0_i32_0 = arith.constant 0 : i32
    return %arg0, %c0_i32 : i32, i32
  }
}

</mosaic_0001>

<llo_original>
// kernel: tpu_custom_call.1
$region0: #{tpu_custom_call.1}
  #allocation0 [shape = 'u32[]', space=smem, size = 0x4, offset = 0x4, fixed_abs, tag = 'smem constant byte address 0x4 - core index']
  #allocation1 [shape = 'u32[144,128]{1,0:T(1,128)}', space=vmem, size = 0x12000, scoped, tag = 'internal scratch']
  %s0 = inlined_call_operand.hbm [shape: bf16[16,32], index: 0, kind: input, shape index: {}]
  %s1 = inlined_call_operand.hbm [shape: bf16[16,32], index: 1, kind: input, shape index: {}]
  %s2 = inlined_call_operand.hbm [shape: bf16[16,32], index: 2, kind: input, shape index: {}]
  %s3 = inlined_call_operand.hbm [shape: bf16[32,32], index: 3, kind: input, shape index: {}]
  %s4 = inlined_call_operand.hbm [shape: bf16[32,32], index: 4, kind: input, shape index: {}]
  %s5 = inlined_call_operand.hbm [shape: bf16[32,32], index: 5, kind: input, shape index: {}]
  %s6 = inlined_call_operand.hbm [shape: bf16[16,32], index: 6, kind: output, shape index: {0}]
  %s7 = inlined_call_operand.hbm [shape: bf16[16,32], index: 7, kind: output, shape index: {1}]
  %s8 = inlined_call_operand.hbm [shape: bf16[16,32], index: 8, kind: output, shape index: {2}]
  %9 = xla_tuple %s6, %s7, %s8
  %s10 = sld [smem:[#allocation0]]
  $region74: #{tpu_custom_call.1} parent=0
    _
  %s12 = ssub.s32 1, %s10
  %s13 = scalar_select 0, %s12, %s10
  $region1: #{tpu_custom_call.1} parent=0
    #allocation2 [shape = 'u8[4096]{0}', space=vmem, size = 0x1000, scoped, tag = 'input window, operand 0, single buffered']
    #allocation3 [shape = 's32[1]{0}', space=sflag, size = 0x4, scoped, tag = 'scoped memory for tpu_custom_call.1']
    #allocation4 [shape = 's32[1]{0}', space=sflag, size = 0x4, scoped, tag = 'scoped memory for tpu_custom_call.1']
    #allocation5 [shape = 'u8[4096]{0}', space=vmem, size = 0x1000, scoped, tag = 'input window, operand 1, single buffered']
    #allocation6 [shape = 's32[1]{0}', space=sflag, size = 0x4, scoped, tag = 'scoped memory for tpu_custom_call.1']
    #allocation7 [shape = 'u8[4096]{0}', space=vmem, size = 0x1000, scoped, tag = 'input window, operand 2, single buffered']
    #allocation8 [shape = 'u8[8192]{0}', space=vmem, size = 0x2000, scoped, tag = 'input window, operand 3, single buffered']
    #allocation9 [shape = 's32[1]{0}', space=sflag, size = 0x4, scoped, tag = 'scoped memory for tpu_custom_call.1']
    #allocation10 [shape = 'u8[8192]{0}', space=vmem, size = 0x2000, scoped, tag = 'input window, operand 4, single buffered']
    #allocation11 [shape = 'u8[8192]{0}', space=vmem, size = 0x2000, scoped, tag = 'input window, operand 5, single buffered']
    #allocation12 [shape = 's32[1]{0}', space=sflag, size = 0x4, scoped, tag = 'scoped memory for tpu_custom_call.1']
    #allocation13 [shape = 'u8[4096]{0}', space=vmem, size = 0x1000, scoped, tag = 'output window, operand 0, single buffered']
    #allocation14 [shape = 'u8[4096]{0}', space=vmem, size = 0x1000, scoped, tag = 'output window, operand 1, single buffered']
    #allocation15 [shape = 's32[1]{0}', space=sflag, size = 0x4, scoped, tag = 'scoped memory for tpu_custom_call.1']
    #allocation16 [shape = 'u8[4096]{0}', space=vmem, size = 0x1000, scoped, tag = 'output window, operand 2, single buffered']
    %14 = vsyncpa [#allocation3], 0
    %15 = vsyncpa [#allocation6], 0
    %16 = vsyncpa [#allocation9], 0
    %17 = vsyncpa [#allocation12], 0
    %18 = vsyncpa [#allocation4], 0
    %19 = vsyncpa [#allocation15], 0
    // Predicated region
    $region2: #{tpu_custom_call.1} parent=1 // pred_check
      _
    $region3: #{tpu_custom_call.1} parent=1 // pred_check_branch
      %21 = sbr.rel (0) target = $region5
    $region4: #{tpu_custom_call.1} parent=1 // pred_region
      %s23 = ssub.s32 128, 128
      %24 = vsyncadd [#allocation3], %s23
      %s25 = sshll.u32 [#allocation2], 4
      %s26 = int_to_ptr.vmem [resolvable:$true] %s25
      %31 = dma.hbm_to_vmem [thread:$0]  %s0, 128, %s26, [#allocation3], 64, 64, 4
    $region5: #{tpu_custom_call.1} parent=1 // pred_fallthru
      _
    // Predicated region
    $region6: #{tpu_custom_call.1} parent=1 // pred_check
      _
    $region7: #{tpu_custom_call.1} parent=1 // pred_check_branch
      %33 = sbr.rel (0) target = $region9
    $region8: #{tpu_custom_call.1} parent=1 // pred_region
      %s35 = ssub.s32 128, 128
      %36 = vsyncadd [#allocation6], %s35
      %s37 = sshll.u32 [#allocation5], 4
      %s38 = int_to_ptr.vmem [resolvable:$true] %s37
      %43 = dma.hbm_to_vmem [thread:$0]  %s1, 128, %s38, [#allocation6], 64, 64, 4
    $region9: #{tpu_custom_call.1} parent=1 // pred_fallthru
      _
    // Predicated region
    $region10: #{tpu_custom_call.1} parent=1 // pred_check
      _
    $region11: #{tpu_custom_call.1} parent=1 // pred_check_branch
      %45 = sbr.rel (0) target = $region13
    $region12: #{tpu_custom_call.1} parent=1 // pred_region
      %s47 = ssub.s32 128, 128
      %48 = vsyncadd [#allocation6], %s47
      %s49 = sshll.u32 [#allocation7], 4
      %s50 = int_to_ptr.vmem [resolvable:$true] %s49
      %55 = dma.hbm_to_vmem [thread:$0]  %s2, 128, %s50, [#allocation6], 64, 64, 4
    $region13: #{tpu_custom_call.1} parent=1 // pred_fallthru
      _
    // Predicated region
    $region14: #{tpu_custom_call.1} parent=1 // pred_check
      _
    $region15: #{tpu_custom_call.1} parent=1 // pred_check_branch
      %57 = sbr.rel (0) target = $region17
    $region16: #{tpu_custom_call.1} parent=1 // pred_region
      %s59 = ssub.s32 256, 256
      %60 = vsyncadd [#allocation9], %s59
      %s61 = sshll.u32 [#allocation8], 4
      %s62 = int_to_ptr.vmem [resolvable:$true] %s61
      %67 = dma.hbm_to_vmem [thread:$0]  %s3, 256, %s62, [#allocation9], 64, 64, 4
    $region17: #{tpu_custom_call.1} parent=1 // pred_fallthru
      _
    // Predicated region
    $region18: #{tpu_custom_call.1} parent=1 // pred_check
      _
    $region19: #{tpu_custom_call.1} parent=1 // pred_check_branch
      %69 = sbr.rel (0) target = $region21
    $region20: #{tpu_custom_call.1} parent=1 // pred_region
      %s71 = ssub.s32 256, 256
      %72 = vsyncadd [#allocation9], %s71
      %s73 = sshll.u32 [#allocation10], 4
      %s74 = int_to_ptr.vmem [resolvable:$true] %s73
      %79 = dma.hbm_to_vmem [thread:$0]  %s4, 256, %s74, [#allocation9], 64, 64, 4
    $region21: #{tpu_custom_call.1} parent=1 // pred_fallthru
      _
    // Predicated region
    $region22: #{tpu_custom_call.1} parent=1 // pred_check
      _
    $region23: #{tpu_custom_call.1} parent=1 // pred_check_branch
      %81 = sbr.rel (0) target = $region25
    $region24: #{tpu_custom_call.1} parent=1 // pred_region
      %s83 = ssub.s32 256, 256
      %84 = vsyncadd [#allocation12], %s83
      %s85 = sshll.u32 [#allocation11], 4
      %s86 = int_to_ptr.vmem [resolvable:$true] %s85
      %91 = dma.hbm_to_vmem [thread:$0]  %s5, 256, %s86, [#allocation12], 64, 64, 4
    $region25: #{tpu_custom_call.1} parent=1 // pred_fallthru
      _
    // Predicated region
    $region26: #{tpu_custom_call.1} parent=1 // pred_check
      _
    $region27: #{tpu_custom_call.1} parent=1 // pred_check_branch
      %93 = sbr.rel (0) target = $region29
    $region28: #{tpu_custom_call.1} parent=1 // pred_region
      %94 = dma.done [#allocation3], 128
    $region29: #{tpu_custom_call.1} parent=1 // pred_fallthru
      _
    // Predicated region
    $region30: #{tpu_custom_call.1} parent=1 // pred_check
      _
    $region31: #{tpu_custom_call.1} parent=1 // pred_check_branch
      %96 = sbr.rel (0) target = $region33
    $region32: #{tpu_custom_call.1} parent=1 // pred_region
      %97 = dma.done [#allocation6], 128
    $region33: #{tpu_custom_call.1} parent=1 // pred_fallthru
      _
    // Predicated region
    $region34: #{tpu_custom_call.1} parent=1 // pred_check
      _
    $region35: #{tpu_custom_call.1} parent=1 // pred_check_branch
      %99 = sbr.rel (0) target = $region37
    $region36: #{tpu_custom_call.1} parent=1 // pred_region
      %100 = dma.done [#allocation6], 128
    $region37: #{tpu_custom_call.1} parent=1 // pred_fallthru
      _
    // Predicated region
    $region38: #{tpu_custom_call.1} parent=1 // pred_check
      _
    $region39: #{tpu_custom_call.1} parent=1 // pred_check_branch
      %102 = sbr.rel (0) target = $region41
    $region40: #{tpu_custom_call.1} parent=1 // pred_region
      %103 = dma.done [#allocation9], 256
    $region41: #{tpu_custom_call.1} parent=1 // pred_fallthru
      _
    // Predicated region
    $region42: #{tpu_custom_call.1} parent=1 // pred_check
      _
    $region43: #{tpu_custom_call.1} parent=1 // pred_check_branch
      %105 = sbr.rel (0) target = $region45
    $region44: #{tpu_custom_call.1} parent=1 // pred_region
      %106 = dma.done [#allocation9], 256
    $region45: #{tpu_custom_call.1} parent=1 // pred_fallthru
      _
    // Predicated region
    $region46: #{tpu_custom_call.1} parent=1 // pred_check
      _
    $region47: #{tpu_custom_call.1} parent=1 // pred_check_branch
      %108 = sbr.rel (0) target = $region49
    $region48: #{tpu_custom_call.1} parent=1 // pred_region
      %109 = dma.done [#allocation12], 256
    $region49: #{tpu_custom_call.1} parent=1 // pred_fallthru
      _
    %v111 = vld [vmem:[#allocation2] sm:$0xf]
    %v112 = vld [vmem:[#allocation2 + $0x4] sm:$0xf]
    %v113 = vld [vmem:[#allocation8] sm:$0xf]
    %v114 = vld [vmem:[#allocation8 + $0x4] sm:$0xf]
    %v115 = vld [vmem:[#allocation8 + $0x8] sm:$0xf]
    %v116 = vld [vmem:[#allocation8 + $0xc] sm:$0xf]
    %v119 = vunpack.c.l.b16 %v111
    %v120 = vunpack.c.l.b16 %v112
    %v121 = vpack.c.b16 %v120, %v119
    %v126 = vunpack.c.l.b16 %v113
    %v127 = vunpack.c.l.b16 %v114
    %v128 = vunpack.c.l.b16 %v115
    %v129 = vunpack.c.l.b16 %v116
    %v130 = vpack.c.b16 %v127, %v126
    %v131 = vpack.c.b16 %v129, %v128
    %vm132 = vcmask 261120
    %v134 = vsel %vm132, %v121, 0
    %v137 = vsel %vm132, %v130, 0
    %v140 = vsel %vm132, %v131, 0
    %142 = vmatprep.subr.bf16.mxu0 0
    %143 = vmatpush1.bf16.xpose.msra.mxu0 %v137
    %144 = vmatprep.subr.bf16.mxu0 0
    %145 = vmatpush1.bf16.xpose.msra.mxu0 %v140
    %146 = vmatprep.subr.bf16.mxu0 0
    %147 = vmatpush1.bf16.xpose.msra.mxu0 0
    %148 = vmatprep.subr.bf16.mxu0 0
    %149 = vmatpush1.bf16.xpose.msra.mxu0 0
    %150 = vmatprep.subr.bf16.mxu0 0
    %151 = vmatpush1.bf16.xpose.msra.mxu0 0
    %152 = vmatprep.subr.bf16.mxu0 0
    %153 = vmatpush1.bf16.xpose.msra.mxu0 0
    %154 = vmatprep.subr.bf16.mxu0 0
    %155 = vmatpush1.bf16.xpose.msra.mxu0 0
    %156 = vmatprep.subr.bf16.mxu0 0
    %157 = vmatpush1.bf16.xpose.msra.mxu0 0
    %158 = vmatprep.subr.bf16.mxu0 0
    %159 = vmatpush1.bf16.xpose.msra.mxu0 0
    %160 = vmatprep.subr.bf16.mxu0 0
    %161 = vmatpush1.bf16.xpose.msra.mxu0 0
    %162 = vmatprep.subr.bf16.mxu0 0
    %163 = vmatpush1.bf16.xpose.msra.mxu0 0
    %164 = vmatprep.subr.bf16.mxu0 0
    %165 = vmatpush1.bf16.xpose.msra.mxu0 0
    %166 = vmatprep.subr.bf16.mxu0 0
    %167 = vmatpush1.bf16.xpose.msra.mxu0 0
    %168 = vmatprep.subr.bf16.mxu0 0
    %169 = vmatpush1.bf16.xpose.msra.mxu0 0
    %170 = vmatprep.subr.bf16.mxu0 0
    %171 = vmatpush1.bf16.xpose.msra.mxu0 0
    %172 = vmatprep.subr.bf16.mxu0 0
    %173 = vmatpush1.bf16.xpose.msra.mxu0 0
    %174 = vmatprep.mubr.bf16.mxu0 0
    %175 = vmatmul.mubr.bf16.gmra.mrb[0].mxu0 %v134
    %v176 = vpop.f32.mrb[0].mxu0
    %v177 = vadd.f32 0.0, %v176
    %v178 = vpop.f32.mrb[0].mxu0
    %v179 = vpop.f32.mrb[0].mxu0
    %v180 = vadd.f32 0.0, %v179
    %v181 = vpop.f32.mrb[0].mxu0
    %182 = vdwg.mxu0
    %v183 = vpack.c.bf16 %v180, %v177
    %v185 = vunpack.c.l.b16 %v183
    %v186 = vunpack.c.h.b16 %v183
    %v187 = vpack.c.b16 %v185, %v185
    %v188 = vpack.c.b16 %v186, %v186
    %vm191 = vcmask 257024
    %192 = vst.msk [vmem:[#allocation13] sm:$0xf] %vm191, %v187
    %193 = vst.msk [vmem:[#allocation13 + $0x4] sm:$0xf] %vm191, %v188
    %v194 = vld [vmem:[#allocation5] sm:$0xf]
    %v195 = vld [vmem:[#allocation5 + $0x4] sm:$0xf]
    %v196 = vld [vmem:[#allocation10] sm:$0xf]
    %v197 = vld [vmem:[#allocation10 + $0x4] sm:$0xf]
    %v198 = vld [vmem:[#allocation10 + $0x8] sm:$0xf]
    %v199 = vld [vmem:[#allocation10 + $0xc] sm:$0xf]
    %v202 = vunpack.c.l.b16 %v194
    %v203 = vunpack.c.l.b16 %v195
    %v204 = vpack.c.b16 %v203, %v202
    %v209 = vunpack.c.l.b16 %v196
    %v210 = vunpack.c.l.b16 %v197
    %v211 = vunpack.c.l.b16 %v198
    %v212 = vunpack.c.l.b16 %v199
    %v213 = vpack.c.b16 %v210, %v209
    %v214 = vpack.c.b16 %v212, %v211
    %v216 = vsel %vm132, %v204, 0
    %v219 = vsel %vm132, %v213, 0
    %v222 = vsel %vm132, %v214, 0
    %224 = vmatprep.subr.bf16.mxu0 0
    %225 = vmatpush1.bf16.xpose.msra.mxu0 %v219
    %226 = vmatprep.subr.bf16.mxu0 0
    %227 = vmatpush1.bf16.xpose.msra.mxu0 %v222
    %228 = vmatprep.subr.bf16.mxu0 0
    %229 = vmatpush1.bf16.xpose.msra.mxu0 0
    %230 = vmatprep.subr.bf16.mxu0 0
    %231 = vmatpush1.bf16.xpose.msra.mxu0 0
    %232 = vmatprep.subr.bf16.mxu0 0
    %233 = vmatpush1.bf16.xpose.msra.mxu0 0
    %234 = vmatprep.subr.bf16.mxu0 0
    %235 = vmatpush1.bf16.xpose.msra.mxu0 0
    %236 = vmatprep.subr.bf16.mxu0 0
    %237 = vmatpush1.bf16.xpose.msra.mxu0 0
    %238 = vmatprep.subr.bf16.mxu0 0
    %239 = vmatpush1.bf16.xpose.msra.mxu0 0
    %240 = vmatprep.subr.bf16.mxu0 0
    %241 = vmatpush1.bf16.xpose.msra.mxu0 0
    %242 = vmatprep.subr.bf16.mxu0 0
    %243 = vmatpush1.bf16.xpose.msra.mxu0 0
    %244 = vmatprep.subr.bf16.mxu0 0
    %245 = vmatpush1.bf16.xpose.msra.mxu0 0
    %246 = vmatprep.subr.bf16.mxu0 0
    %247 = vmatpush1.bf16.xpose.msra.mxu0 0
    %248 = vmatprep.subr.bf16.mxu0 0
    %249 = vmatpush1.bf16.xpose.msra.mxu0 0
    %250 = vmatprep.subr.bf16.mxu0 0
    %251 = vmatpush1.bf16.xpose.msra.mxu0 0
    %252 = vmatprep.subr.bf16.mxu0 0
    %253 = vmatpush1.bf16.xpose.msra.mxu0 0
    %254 = vmatprep.subr.bf16.mxu0 0
    %255 = vmatpush1.bf16.xpose.msra.mxu0 0
    %256 = vmatprep.mubr.bf16.mxu0 0
    %257 = vmatmul.mubr.bf16.gmra.mrb[0].mxu0 %v216
    %v258 = vpop.f32.mrb[0].mxu0
    %v259 = vadd.f32 0.0, %v258
    %v260 = vpop.f32.mrb[0].mxu0
    %v261 = vpop.f32.mrb[0].mxu0
    %v262 = vadd.f32 0.0, %v261
    %v263 = vpop.f32.mrb[0].mxu0
    %264 = vdwg.mxu0
    %v265 = vpack.c.bf16 %v262, %v259
    %v267 = vunpack.c.l.b16 %v265
    %v268 = vunpack.c.h.b16 %v265
    %v269 = vpack.c.b16 %v267, %v267
    %v270 = vpack.c.b16 %v268, %v268
    %273 = vst.msk [vmem:[#allocation14] sm:$0xf] %vm191, %v269
    %274 = vst.msk [vmem:[#allocation14 + $0x4] sm:$0xf] %vm191, %v270
    %v275 = vld [vmem:[#allocation7] sm:$0xf]
    %v276 = vld [vmem:[#allocation7 + $0x4] sm:$0xf]
    %v277 = vld [vmem:[#allocation11] sm:$0xf]
    %v278 = vld [vmem:[#allocation11 + $0x4] sm:$0xf]
    %v279 = vld [vmem:[#allocation11 + $0x8] sm:$0xf]
    %v280 = vld [vmem:[#allocation11 + $0xc] sm:$0xf]
    %v283 = vunpack.c.l.b16 %v275
    %v284 = vunpack.c.l.b16 %v276
    %v285 = vpack.c.b16 %v284, %v283
    %v290 = vunpack.c.l.b16 %v277
    %v291 = vunpack.c.l.b16 %v278
    %v292 = vunpack.c.l.b16 %v279
    %v293 = vunpack.c.l.b16 %v280
    %v294 = vpack.c.b16 %v291, %v290
    %v295 = vpack.c.b16 %v293, %v292
    %v297 = vsel %vm132, %v285, 0
    %v300 = vsel %vm132, %v294, 0
    %v303 = vsel %vm132, %v295, 0
    %305 = vmatprep.subr.bf16.mxu0 0
    %306 = vmatpush1.bf16.xpose.msra.mxu0 %v300
    %307 = vmatprep.subr.bf16.mxu0 0
    %308 = vmatpush1.bf16.xpose.msra.mxu0 %v303
    %309 = vmatprep.subr.bf16.mxu0 0
    %310 = vmatpush1.bf16.xpose.msra.mxu0 0
    %311 = vmatprep.subr.bf16.mxu0 0
    %312 = vmatpush1.bf16.xpose.msra.mxu0 0
    %313 = vmatprep.subr.bf16.mxu0 0
    %314 = vmatpush1.bf16.xpose.msra.mxu0 0
    %315 = vmatprep.subr.bf16.mxu0 0
    %316 = vmatpush1.bf16.xpose.msra.mxu0 0
    %317 = vmatprep.subr.bf16.mxu0 0
    %318 = vmatpush1.bf16.xpose.msra.mxu0 0
    %319 = vmatprep.subr.bf16.mxu0 0
    %320 = vmatpush1.bf16.xpose.msra.mxu0 0
    %321 = vmatprep.subr.bf16.mxu0 0
    %322 = vmatpush1.bf16.xpose.msra.mxu0 0
    %323 = vmatprep.subr.bf16.mxu0 0
    %324 = vmatpush1.bf16.xpose.msra.mxu0 0
    %325 = vmatprep.subr.bf16.mxu0 0
    %326 = vmatpush1.bf16.xpose.msra.mxu0 0
    %327 = vmatprep.subr.bf16.mxu0 0
    %328 = vmatpush1.bf16.xpose.msra.mxu0 0
    %329 = vmatprep.subr.bf16.mxu0 0
    %330 = vmatpush1.bf16.xpose.msra.mxu0 0
    %331 = vmatprep.subr.bf16.mxu0 0
    %332 = vmatpush1.bf16.xpose.msra.mxu0 0
    %333 = vmatprep.subr.bf16.mxu0 0
    %334 = vmatpush1.bf16.xpose.msra.mxu0 0
    %335 = vmatprep.subr.bf16.mxu0 0
    %336 = vmatpush1.bf16.xpose.msra.mxu0 0
    %337 = vmatprep.mubr.bf16.mxu0 0
    %338 = vmatmul.mubr.bf16.gmra.mrb[0].mxu0 %v297
    %v339 = vpop.f32.mrb[0].mxu0
    %v340 = vadd.f32 0.0, %v339
    %v341 = vpop.f32.mrb[0].mxu0
    %v342 = vpop.f32.mrb[0].mxu0
    %v343 = vadd.f32 0.0, %v342
    %v344 = vpop.f32.mrb[0].mxu0
    %345 = vdwg.mxu0
    %v346 = vpack.c.bf16 %v343, %v340
    %v348 = vunpack.c.l.b16 %v346
    %v349 = vunpack.c.h.b16 %v346
    %v350 = vpack.c.b16 %v348, %v348
    %v351 = vpack.c.b16 %v349, %v349
    %354 = vst.msk [vmem:[#allocation16] sm:$0xf] %vm191, %v350
    %355 = vst.msk [vmem:[#allocation16 + $0x4] sm:$0xf] %vm191, %v351
    // Predicated region
    $region50: #{tpu_custom_call.1} parent=1 // pred_check
      _
    $region51: #{tpu_custom_call.1} parent=1 // pred_check_branch
      %357 = sbr.rel (0) target = $region53
    $region52: #{tpu_custom_call.1} parent=1 // pred_region
      %s359 = ssub.s32 128, 128
      %360 = vsyncadd [#allocation4], %s359
      %s361 = sshll.u32 [#allocation13], 4
      %s362 = int_to_ptr.vmem [resolvable:$true] %s361
      %367 = dma.vmem_to_hbm [thread:$0]  %s362, 128, %s6, [#allocation4], 64, 64, 4
    $region53: #{tpu_custom_call.1} parent=1 // pred_fallthru
      _
    // Predicated region
    $region54: #{tpu_custom_call.1} parent=1 // pred_check
      _
    $region55: #{tpu_custom_call.1} parent=1 // pred_check_branch
      %369 = sbr.rel (0) target = $region57
    $region56: #{tpu_custom_call.1} parent=1 // pred_region
      %s371 = ssub.s32 128, 128
      %372 = vsyncadd [#allocation15], %s371
      %s373 = sshll.u32 [#allocation14], 4
      %s374 = int_to_ptr.vmem [resolvable:$true] %s373
      %379 = dma.vmem_to_hbm [thread:$0]  %s374, 128, %s7, [#allocation15], 64, 64, 4
    $region57: #{tpu_custom_call.1} parent=1 // pred_fallthru
      _
    // Predicated region
    $region58: #{tpu_custom_call.1} parent=1 // pred_check
      _
    $region59: #{tpu_custom_call.1} parent=1 // pred_check_branch
      %381 = sbr.rel (0) target = $region61
    $region60: #{tpu_custom_call.1} parent=1 // pred_region
      %s383 = ssub.s32 128, 128
      %384 = vsyncadd [#allocation15], %s383
      %s385 = sshll.u32 [#allocation16], 4
      %s386 = int_to_ptr.vmem [resolvable:$true] %s385
      %391 = dma.vmem_to_hbm [thread:$0]  %s386, 128, %s8, [#allocation15], 64, 64, 4
    $region61: #{tpu_custom_call.1} parent=1 // pred_fallthru
      _
    // Predicated region
    $region62: #{tpu_custom_call.1} parent=1 // pred_check
      _
    $region63: #{tpu_custom_call.1} parent=1 // pred_check_branch
      %393 = sbr.rel (0) target = $region65
    $region64: #{tpu_custom_call.1} parent=1 // pred_region
      %394 = dma.done [#allocation4], 128
    $region65: #{tpu_custom_call.1} parent=1 // pred_fallthru
      _
    // Predicated region
    $region66: #{tpu_custom_call.1} parent=1 // pred_check
      _
    $region67: #{tpu_custom_call.1} parent=1 // pred_check_branch
      %396 = sbr.rel (0) target = $region69
    $region68: #{tpu_custom_call.1} parent=1 // pred_region
      %397 = dma.done [#allocation15], 128
    $region69: #{tpu_custom_call.1} parent=1 // pred_fallthru
      _
    // Predicated region
    $region70: #{tpu_custom_call.1} parent=1 // pred_check
      _
    $region71: #{tpu_custom_call.1} parent=1 // pred_check_branch
      %399 = sbr.rel (0) target = $region73
    $region72: #{tpu_custom_call.1} parent=1 // pred_region
      %400 = dma.done [#allocation15], 128
    $region73: #{tpu_custom_call.1} parent=1 // pred_fallthru
      _
    %401 = vsyncpa [#allocation3], 1
    %402 = vsyncpa [#allocation6], 1
    %403 = vsyncpa [#allocation9], 1
    %404 = vsyncpa [#allocation12], 1
    %405 = vsyncpa [#allocation4], 1
    %406 = vsyncpa [#allocation15], 1

</llo_original>
